<compile_context>
chip_gen: v7x
topology: tpu7x:2x2x1
jax: 0.10.0
libtpu: 0.0.40
codegen_flags: <defaults>
</compile_context>

<pallas_src>
import functools

import jax
import jax.numpy as jnp
from jax import lax
from jax.experimental import pallas as pl
from jax.experimental.pallas import tpu as pltpu

LN_EPS = 1e-5  # torch.nn.LayerNorm default


def _layernorm(h, gamma, beta):
    mu = jnp.mean(h, axis=-1, keepdims=True)
    var = jnp.mean((h - mu) ** 2, axis=-1, keepdims=True)
    return (h - mu) * lax.rsqrt(var + LN_EPS) * gamma + beta


def radial_kernel(x_ref, vecs_ref, w2_ref, w3b_ref, o_ref, *, input_dim, fold):
    """x_ref:    (T//fold, fold*input_dim)   row-folded input tile
       vecs_ref: (input_dim + 6, mid)        rows = [w1_0..w1_{d-1}, b1, g1, be1, b2, g2, be2]
       w2_ref:   (mid, mid)
       w3b_ref:  (mid + 1, out_feat)         rows = [w3 ; b3]
       o_ref:    (T//fold, fold*out_feat)    row-folded, lane-dense output tile
    """
    f32 = jnp.float32
    mid = w2_ref.shape[0]

    # Resident parameters (small; loaded once per grid step).
    w2 = w2_ref[...].astype(f32)
    w3 = w3b_ref[:mid, :].astype(f32)
    b3 = w3b_ref[mid:mid + 1, :].astype(f32)

    w1_rows = [vecs_ref[d:d + 1, :].astype(f32) for d in range(input_dim)]
    b1 = vecs_ref[input_dim + 0:input_dim + 1, :].astype(f32)
    g1 = vecs_ref[input_dim + 1:input_dim + 2, :].astype(f32)
    be1 = vecs_ref[input_dim + 2:input_dim + 3, :].astype(f32)
    b2 = vecs_ref[input_dim + 3:input_dim + 4, :].astype(f32)
    g2 = vecs_ref[input_dim + 4:input_dim + 5, :].astype(f32)
    be2 = vecs_ref[input_dim + 5:input_dim + 6, :].astype(f32)

    x = x_ref[...].astype(f32)  # (rows, fold*input_dim)

    outs = []
    for j in range(fold):
        xj = x[:, j * input_dim:(j + 1) * input_dim]  # (rows, input_dim)

        # --- Linear(input_dim, mid) ---
        if input_dim <= 8:
            # rank-`input_dim` update on the VPU; avoids a degenerate K=1 MXU matmul
            h = xj[:, 0:1] * w1_rows[0]
            for d in range(1, input_dim):
                h = h + xj[:, d:d + 1] * w1_rows[d]
            h = h + b1
        else:
            h = jnp.dot(xj, vecs_ref[:input_dim, :].astype(f32),
                        preferred_element_type=f32) + b1
        h = _layernorm(h, g1, be1)
        h = jnp.maximum(h, 0.0)

        # --- Linear(mid, mid) -> LayerNorm -> ReLU ---
        h = jnp.dot(h, w2, preferred_element_type=f32) + b2
        h = _layernorm(h, g2, be2)
        h = jnp.maximum(h, 0.0)

        # --- Linear(mid, out_feat) ---
        outs.append(jnp.dot(h, w3, preferred_element_type=f32) + b3)

    y = outs[0] if fold == 1 else jnp.concatenate(outs, axis=-1)
    o_ref[...] = y.astype(o_ref.dtype)


def radial_func_forward(x, params, *, num_freq, in_dim, out_dim, tile_rows=1024):
    """x: (b, n, m, input_dim).  Returns (b, n, m, out_dim, 1, in_dim, 1, num_freq)."""
    b, n, m, input_dim = x.shape
    rows = b * n * m
    out_feat = num_freq * in_dim * out_dim
    mid_dim = params["w2"].shape[0]

    # Lane fold so the output tile's last dim is a multiple of 128 (unmasked vst).
    if out_feat % 128 == 0:
        fold = 1
    elif 128 % out_feat == 0:
        fold = 128 // out_feat
    else:
        fold = 1

    # Row tile: as large as allowed (mem-bound kernel), but keep >= 2 grid steps
    # when possible (v7x megacore), rounded to a multiple of 8*fold so both the
    # folded input block and the folded output block satisfy (8,128) tiling.
    unit = 8 * fold
    tr = min(int(tile_rows), max(unit, pl.cdiv(rows, 2)))
    tr = pl.cdiv(tr, unit) * unit

    padded_rows = pl.cdiv(rows, tr) * tr
    n_tiles = padded_rows // tr

    x2 = x.reshape(rows, input_dim)
    if padded_rows != rows:
        x2 = jnp.pad(x2, ((0, padded_rows - rows), (0, 0)))
    # Row-major fold: x_fold[r, j*input_dim + d] == x2[r*fold + j, d]
    x_fold = x2.reshape(padded_rows // fold, fold * input_dim)

    # Pack small parameters: fewer inputs -> fewer per-step DMAs/descriptors.
    vecs = jnp.concatenate(
        [params["w1"], params["b1"], params["g1"], params["be1"],
         params["b2"], params["g2"], params["be2"]], axis=0)        # (input_dim+6, mid)
    w3b = jnp.concatenate([params["w3"], params["b3"]], axis=0)      # (mid+1, out_feat)

    kernel = functools.partial(radial_kernel, input_dim=input_dim, fold=fold)

    grid_spec = pltpu.PrefetchScalarGridSpec(
        num_scalar_prefetch=0,
        grid=(n_tiles,),
        in_specs=[
            pl.BlockSpec((tr // fold, fold * input_dim), lambda i: (i, 0)),  # x tile
            pl.BlockSpec(tuple(vecs.shape), lambda i: (0, 0)),               # packed vecs
            pl.BlockSpec(tuple(params["w2"].shape), lambda i: (0, 0)),       # w2
            pl.BlockSpec(tuple(w3b.shape), lambda i: (0, 0)),                # [w3; b3]
        ],
        out_specs=pl.BlockSpec((tr // fold, fold * out_feat), lambda i: (i, 0)),
    )

    y = pl.pallas_call(
        kernel,
        out_shape=jax.ShapeDtypeStruct((padded_rows // fold, fold * out_feat), x.dtype),
        grid_spec=grid_spec,
        compiler_params=pltpu.CompilerParams(
            dimension_semantics=("parallel",),
            vmem_limit_bytes=32 * 1024 * 1024),
    )(x_fold, vecs, params["w2"], w3b)

    # Undo the row fold (pure row-major reshape, free), drop padding, and apply
    # the einops rearrange '... (o i f) -> ... o () i () f'.
    y = y.reshape(padded_rows, out_feat)[:rows]
    y = y.reshape(b, n, m, out_dim, in_dim, num_freq)
    return y[:, :, :, :, None, :, None, :]


def init_params(key, input_dim, mid_dim, out_feat):
    """Deterministic synthetic parameter init."""
    ks = jax.random.split(key, 6)

    def kaiming_uniform(k, fan_in, fan_out):
        bound = (6.0 / fan_in) ** 0.5
        return jax.random.uniform(k, (fan_in, fan_out), jnp.float32, -bound, bound)

    def bias_uniform(k, fan_in, dim):
        bound = 1.0 / (fan_in ** 0.5)
        return jax.random.uniform(k, (1, dim), jnp.float32, -bound, bound)

    return dict(
        w1=kaiming_uniform(ks[0], input_dim, mid_dim),
        b1=bias_uniform(ks[1], input_dim, mid_dim),
        g1=jnp.ones((1, mid_dim), jnp.float32),
        be1=jnp.zeros((1, mid_dim), jnp.float32),
        w2=kaiming_uniform(ks[2], mid_dim, mid_dim),
        b2=bias_uniform(ks[3], mid_dim, mid_dim),
        g2=jnp.ones((1, mid_dim), jnp.float32),
        be2=jnp.zeros((1, mid_dim), jnp.float32),
        w3=kaiming_uniform(ks[4], mid_dim, out_feat),
        b3=bias_uniform(ks[5], mid_dim, out_feat),
    )


def radial_func_ref(x, p, *, num_freq, in_dim, out_dim):
    """Pure-JAX reference for correctness check."""
    h = x @ p["w1"] + p["b1"]
    h = _layernorm(h, p["g1"], p["be1"])
    h = jnp.maximum(h, 0.0)
    h = h @ p["w2"] + p["b2"]
    h = _layernorm(h, p["g2"], p["be2"])
    h = jnp.maximum(h, 0.0)
    y = h @ p["w3"] + p["b3"]
    b, n, m, _ = x.shape
    y = y.reshape(b, n, m, out_dim, in_dim, num_freq)
    return y[:, :, :, :, None, :, None, :]


if __name__ == "__main__":
    # Small config consistent with RadialFunc(num_freq, in_dim, out_dim,
    # edge_dim=0, fourier_encode_dist=False, mid_dim=32)
    num_freq, in_dim, out_dim = 4, 4, 4
    edge_dim, num_fourier_features = 0, 0
    mid_dim = 32
    input_dim = edge_dim + 1 + num_fourier_features * 2   # = 1
    out_feat = num_freq * in_dim * out_dim                 # = 64

    b, n, m = 2, 8, 8

    key = jax.random.PRNGKey(0)
    kx, kp = jax.random.split(key)
    x = jax.random.normal(kx, (b, n, m, input_dim), jnp.float32)
    params = init_params(kp, input_dim, mid_dim, out_feat)

    fwd = jax.jit(functools.partial(
        radial_func_forward, num_freq=num_freq, in_dim=in_dim, out_dim=out_dim))
    y = fwd(x, params)
    y = jax.block_until_ready(y)

    y_ref = radial_func_ref(x, params, num_freq=num_freq, in_dim=in_dim, out_dim=out_dim)

    assert y.shape == (b, n, m, out_dim, 1, in_dim, 1, num_freq), y.shape
    assert jnp.allclose(y, y_ref, atol=1e-4, rtol=1e-4)

    print("KERNEL_OK")
</pallas_src>

<mosaic_0001>
module attributes {stable_mosaic.version = 11 : i64} {
  func.func @radial_kernel(%arg0: i32, %arg1: memref<32x2xf32, #tpu.memory_space<vmem>>, %arg2: memref<7x32xf32, #tpu.memory_space<vmem>>, %arg3: memref<32x32xf32, #tpu.memory_space<vmem>>, %arg4: memref<33x64xf32, #tpu.memory_space<vmem>>, %arg5: memref<32x128xf32, #tpu.memory_space<vmem>>) attributes {dimension_semantics = [#tpu.dimension_semantics<parallel>], iteration_bounds = array<i64: 2>, scalar_prefetch = 0 : i64, scratch_operands = 0 : i64, tpu.core_type = #tpu.core_type<tc>, window_params = [{transform_indices = @transform_0, window_bounds = array<i64: 32, 2>}, {pipeline_mode = #tpu.pipeline_mode<synchronous>, transform_indices = @transform_1, window_bounds = array<i64: 7, 32>}, {pipeline_mode = #tpu.pipeline_mode<synchronous>, transform_indices = @transform_2, window_bounds = array<i64: 32, 32>}, {pipeline_mode = #tpu.pipeline_mode<synchronous>, transform_indices = @transform_3, window_bounds = array<i64: 33, 64>}, {transform_indices = @transform_4, window_bounds = array<i64: 32, 128>}]} {
    %c0 = arith.constant 0 : index
    %c0_0 = arith.constant 0 : index
    %0 = vector.load %arg3[%c0, %c0_0] : memref<32x32xf32, #tpu.memory_space<vmem>>, vector<32x32xf32>
    %c0_1 = arith.constant 0 : index
    %c0_2 = arith.constant 0 : index
    %1 = vector.load %arg4[%c0_1, %c0_2] : memref<33x64xf32, #tpu.memory_space<vmem>>, vector<32x64xf32>
    %c32 = arith.constant 32 : index
    %c0_3 = arith.constant 0 : index
    %2 = vector.load %arg4[%c32, %c0_3] : memref<33x64xf32, #tpu.memory_space<vmem>>, vector<1x64xf32>
    %c0_4 = arith.constant 0 : index
    %c0_5 = arith.constant 0 : index
    %3 = vector.load %arg2[%c0_4, %c0_5] : memref<7x32xf32, #tpu.memory_space<vmem>>, vector<1x32xf32>
    %c1 = arith.constant 1 : index
    %c0_6 = arith.constant 0 : index
    %4 = vector.load %arg2[%c1, %c0_6] : memref<7x32xf32, #tpu.memory_space<vmem>>, vector<1x32xf32>
    %c2 = arith.constant 2 : index
    %c0_7 = arith.constant 0 : index
    %5 = vector.load %arg2[%c2, %c0_7] : memref<7x32xf32, #tpu.memory_space<vmem>>, vector<1x32xf32>
    %c3 = arith.constant 3 : index
    %c0_8 = arith.constant 0 : index
    %6 = vector.load %arg2[%c3, %c0_8] : memref<7x32xf32, #tpu.memory_space<vmem>>, vector<1x32xf32>
    %c4 = arith.constant 4 : index
    %c0_9 = arith.constant 0 : index
    %7 = vector.load %arg2[%c4, %c0_9] : memref<7x32xf32, #tpu.memory_space<vmem>>, vector<1x32xf32>
    %c5 = arith.constant 5 : index
    %c0_10 = arith.constant 0 : index
    %8 = vector.load %arg2[%c5, %c0_10] : memref<7x32xf32, #tpu.memory_space<vmem>>, vector<1x32xf32>
    %c6 = arith.constant 6 : index
    %c0_11 = arith.constant 0 : index
    %9 = vector.load %arg2[%c6, %c0_11] : memref<7x32xf32, #tpu.memory_space<vmem>>, vector<1x32xf32>
    %c0_12 = arith.constant 0 : index
    %c0_13 = arith.constant 0 : index
    %10 = vector.load %arg1[%c0_12, %c0_13] : memref<32x2xf32, #tpu.memory_space<vmem>>, vector<32x2xf32>
    %11 = vector.extract_strided_slice %10 {offsets = [0, 0], sizes = [32, 1], strides = [1, 1]} : vector<32x2xf32> to vector<32x1xf32>
    %12 = vector.broadcast %11 : vector<32x1xf32> to vector<32x32xf32>
    %13 = vector.broadcast %3 : vector<1x32xf32> to vector<32x32xf32>
    %14 = arith.mulf %12, %13 : vector<32x32xf32>
    %15 = vector.broadcast %4 : vector<1x32xf32> to vector<32x32xf32>
    %16 = arith.addf %14, %15 : vector<32x32xf32>
    %cst = arith.constant dense<0.000000e+00> : vector<32xf32>
    %17 = vector.multi_reduction <add>, %16, %cst [1] : vector<32x32xf32> to vector<32xf32>
    %18 = vector.shape_cast %17 : vector<32xf32> to vector<32x1xf32>
    %cst_14 = arith.constant 3.200000e+01 : f32
    %19 = vector.broadcast %cst_14 : f32 to vector<32x1xf32>
    %20 = arith.divf %18, %19 : vector<32x1xf32>
    %21 = vector.broadcast %20 : vector<32x1xf32> to vector<32x32xf32>
    %22 = arith.subf %16, %21 : vector<32x32xf32>
    %23 = arith.mulf %22, %22 : vector<32x32xf32>
    %cst_15 = arith.constant dense<0.000000e+00> : vector<32xf32>
    %24 = vector.multi_reduction <add>, %23, %cst_15 [1] : vector<32x32xf32> to vector<32xf32>
    %25 = vector.shape_cast %24 : vector<32xf32> to vector<32x1xf32>
    %cst_16 = arith.constant 3.200000e+01 : f32
    %26 = vector.broadcast %cst_16 : f32 to vector<32x1xf32>
    %27 = arith.divf %25, %26 : vector<32x1xf32>
    %28 = vector.broadcast %20 : vector<32x1xf32> to vector<32x32xf32>
    %29 = arith.subf %16, %28 : vector<32x32xf32>
    %cst_17 = arith.constant 9.99999974E-6 : f32
    %30 = vector.broadcast %cst_17 : f32 to vector<32x1xf32>
    %31 = arith.addf %27, %30 : vector<32x1xf32>
    %32 = math.rsqrt %31 : vector<32x1xf32>
    %33 = vector.broadcast %32 : vector<32x1xf32> to vector<32x32xf32>
    %34 = arith.mulf %29, %33 : vector<32x32xf32>
    %35 = vector.broadcast %5 : vector<1x32xf32> to vector<32x32xf32>
    %36 = arith.mulf %34, %35 : vector<32x32xf32>
    %37 = vector.broadcast %6 : vector<1x32xf32> to vector<32x32xf32>
    %38 = arith.addf %36, %37 : vector<32x32xf32>
    %cst_18 = arith.constant 0.000000e+00 : f32
    %39 = vector.broadcast %cst_18 : f32 to vector<32x32xf32>
    %40 = arith.maximumf %38, %39 : vector<32x32xf32>
    %cst_19 = arith.constant dense<0.000000e+00> : vector<32x32xf32>
    %41 = tpu.matmul %40, %0, %cst_19 {dimension_numbers = #tpu.dot_dimension_numbers<[1], [0], [0], [1], [0, 0, 1, 1], [], []>} : vector<32x32xf32>, vector<32x32xf32>, vector<32x32xf32> -> vector<32x32xf32>
    %42 = vector.broadcast %7 : vector<1x32xf32> to vector<32x32xf32>
    %43 = arith.addf %41, %42 : vector<32x32xf32>
    %cst_20 = arith.constant dense<0.000000e+00> : vector<32xf32>
    %44 = vector.multi_reduction <add>, %43, %cst_20 [1] : vector<32x32xf32> to vector<32xf32>
    %45 = vector.shape_cast %44 : vector<32xf32> to vector<32x1xf32>
    %cst_21 = arith.constant 3.200000e+01 : f32
    %46 = vector.broadcast %cst_21 : f32 to vector<32x1xf32>
    %47 = arith.divf %45, %46 : vector<32x1xf32>
    %48 = vector.broadcast %47 : vector<32x1xf32> to vector<32x32xf32>
    %49 = arith.subf %43, %48 : vector<32x32xf32>
    %50 = arith.mulf %49, %49 : vector<32x32xf32>
    %cst_22 = arith.constant dense<0.000000e+00> : vector<32xf32>
    %51 = vector.multi_reduction <add>, %50, %cst_22 [1] : vector<32x32xf32> to vector<32xf32>
    %52 = vector.shape_cast %51 : vector<32xf32> to vector<32x1xf32>
    %cst_23 = arith.constant 3.200000e+01 : f32
    %53 = vector.broadcast %cst_23 : f32 to vector<32x1xf32>
    %54 = arith.divf %52, %53 : vector<32x1xf32>
    %55 = vector.broadcast %47 : vector<32x1xf32> to vector<32x32xf32>
    %56 = arith.subf %43, %55 : vector<32x32xf32>
    %cst_24 = arith.constant 9.99999974E-6 : f32
    %57 = vector.broadcast %cst_24 : f32 to vector<32x1xf32>
    %58 = arith.addf %54, %57 : vector<32x1xf32>
    %59 = math.rsqrt %58 : vector<32x1xf32>
    %60 = vector.broadcast %59 : vector<32x1xf32> to vector<32x32xf32>
    %61 = arith.mulf %56, %60 : vector<32x32xf32>
    %62 = vector.broadcast %8 : vector<1x32xf32> to vector<32x32xf32>
    %63 = arith.mulf %61, %62 : vector<32x32xf32>
    %64 = vector.broadcast %9 : vector<1x32xf32> to vector<32x32xf32>
    %65 = arith.addf %63, %64 : vector<32x32xf32>
    %cst_25 = arith.constant 0.000000e+00 : f32
    %66 = vector.broadcast %cst_25 : f32 to vector<32x32xf32>
    %67 = arith.maximumf %65, %66 : vector<32x32xf32>
    %cst_26 = arith.constant dense<0.000000e+00> : vector<32x64xf32>
    %68 = tpu.matmul %67, %1, %cst_26 {dimension_numbers = #tpu.dot_dimension_numbers<[1], [0], [0], [1], [0, 0, 1, 1], [], []>} : vector<32x32xf32>, vector<32x64xf32>, vector<32x64xf32> -> vector<32x64xf32>
    %69 = vector.broadcast %2 : vector<1x64xf32> to vector<32x64xf32>
    %70 = arith.addf %68, %69 : vector<32x64xf32>
    %71 = vector.extract_strided_slice %10 {offsets = [0, 1], sizes = [32, 1], strides = [1, 1]} : vector<32x2xf32> to vector<32x1xf32>
    %72 = vector.broadcast %71 : vector<32x1xf32> to vector<32x32xf32>
    %73 = vector.broadcast %3 : vector<1x32xf32> to vector<32x32xf32>
    %74 = arith.mulf %72, %73 : vector<32x32xf32>
    %75 = vector.broadcast %4 : vector<1x32xf32> to vector<32x32xf32>
    %76 = arith.addf %74, %75 : vector<32x32xf32>
    %cst_27 = arith.constant dense<0.000000e+00> : vector<32xf32>
    %77 = vector.multi_reduction <add>, %76, %cst_27 [1] : vector<32x32xf32> to vector<32xf32>
    %78 = vector.shape_cast %77 : vector<32xf32> to vector<32x1xf32>
    %cst_28 = arith.constant 3.200000e+01 : f32
    %79 = vector.broadcast %cst_28 : f32 to vector<32x1xf32>
    %80 = arith.divf %78, %79 : vector<32x1xf32>
    %81 = vector.broadcast %80 : vector<32x1xf32> to vector<32x32xf32>
    %82 = arith.subf %76, %81 : vector<32x32xf32>
    %83 = arith.mulf %82, %82 : vector<32x32xf32>
    %cst_29 = arith.constant dense<0.000000e+00> : vector<32xf32>
    %84 = vector.multi_reduction <add>, %83, %cst_29 [1] : vector<32x32xf32> to vector<32xf32>
    %85 = vector.shape_cast %84 : vector<32xf32> to vector<32x1xf32>
    %cst_30 = arith.constant 3.200000e+01 : f32
    %86 = vector.broadcast %cst_30 : f32 to vector<32x1xf32>
    %87 = arith.divf %85, %86 : vector<32x1xf32>
    %88 = vector.broadcast %80 : vector<32x1xf32> to vector<32x32xf32>
    %89 = arith.subf %76, %88 : vector<32x32xf32>
    %cst_31 = arith.constant 9.99999974E-6 : f32
    %90 = vector.broadcast %cst_31 : f32 to vector<32x1xf32>
    %91 = arith.addf %87, %90 : vector<32x1xf32>
    %92 = math.rsqrt %91 : vector<32x1xf32>
    %93 = vector.broadcast %92 : vector<32x1xf32> to vector<32x32xf32>
    %94 = arith.mulf %89, %93 : vector<32x32xf32>
    %95 = vector.broadcast %5 : vector<1x32xf32> to vector<32x32xf32>
    %96 = arith.mulf %94, %95 : vector<32x32xf32>
    %97 = vector.broadcast %6 : vector<1x32xf32> to vector<32x32xf32>
    %98 = arith.addf %96, %97 : vector<32x32xf32>
    %cst_32 = arith.constant 0.000000e+00 : f32
    %99 = vector.broadcast %cst_32 : f32 to vector<32x32xf32>
    %100 = arith.maximumf %98, %99 : vector<32x32xf32>
    %cst_33 = arith.constant dense<0.000000e+00> : vector<32x32xf32>
    %101 = tpu.matmul %100, %0, %cst_33 {dimension_numbers = #tpu.dot_dimension_numbers<[1], [0], [0], [1], [0, 0, 1, 1], [], []>} : vector<32x32xf32>, vector<32x32xf32>, vector<32x32xf32> -> vector<32x32xf32>
    %102 = vector.broadcast %7 : vector<1x32xf32> to vector<32x32xf32>
    %103 = arith.addf %101, %102 : vector<32x32xf32>
    %cst_34 = arith.constant dense<0.000000e+00> : vector<32xf32>
    %104 = vector.multi_reduction <add>, %103, %cst_34 [1] : vector<32x32xf32> to vector<32xf32>
    %105 = vector.shape_cast %104 : vector<32xf32> to vector<32x1xf32>
    %cst_35 = arith.constant 3.200000e+01 : f32
    %106 = vector.broadcast %cst_35 : f32 to vector<32x1xf32>
    %107 = arith.divf %105, %106 : vector<32x1xf32>
    %108 = vector.broadcast %107 : vector<32x1xf32> to vector<32x32xf32>
    %109 = arith.subf %103, %108 : vector<32x32xf32>
    %110 = arith.mulf %109, %109 : vector<32x32xf32>
    %cst_36 = arith.constant dense<0.000000e+00> : vector<32xf32>
    %111 = vector.multi_reduction <add>, %110, %cst_36 [1] : vector<32x32xf32> to vector<32xf32>
    %112 = vector.shape_cast %111 : vector<32xf32> to vector<32x1xf32>
    %cst_37 = arith.constant 3.200000e+01 : f32
    %113 = vector.broadcast %cst_37 : f32 to vector<32x1xf32>
    %114 = arith.divf %112, %113 : vector<32x1xf32>
    %115 = vector.broadcast %107 : vector<32x1xf32> to vector<32x32xf32>
    %116 = arith.subf %103, %115 : vector<32x32xf32>
    %cst_38 = arith.constant 9.99999974E-6 : f32
    %117 = vector.broadcast %cst_38 : f32 to vector<32x1xf32>
    %118 = arith.addf %114, %117 : vector<32x1xf32>
    %119 = math.rsqrt %118 : vector<32x1xf32>
    %120 = vector.broadcast %119 : vector<32x1xf32> to vector<32x32xf32>
    %121 = arith.mulf %116, %120 : vector<32x32xf32>
    %122 = vector.broadcast %8 : vector<1x32xf32> to vector<32x32xf32>
    %123 = arith.mulf %121, %122 : vector<32x32xf32>
    %124 = vector.broadcast %9 : vector<1x32xf32> to vector<32x32xf32>
    %125 = arith.addf %123, %124 : vector<32x32xf32>
    %cst_39 = arith.constant 0.000000e+00 : f32
    %126 = vector.broadcast %cst_39 : f32 to vector<32x32xf32>
    %127 = arith.maximumf %125, %126 : vector<32x32xf32>
    %cst_40 = arith.constant dense<0.000000e+00> : vector<32x64xf32>
    %128 = tpu.matmul %127, %1, %cst_40 {dimension_numbers = #tpu.dot_dimension_numbers<[1], [0], [0], [1], [0, 0, 1, 1], [], []>} : vector<32x32xf32>, vector<32x64xf32>, vector<32x64xf32> -> vector<32x64xf32>
    %129 = vector.broadcast %2 : vector<1x64xf32> to vector<32x64xf32>
    %130 = arith.addf %128, %129 : vector<32x64xf32>
    %131 = tpu.concatenate %70, %130 in 1 : vector<32x64xf32>, vector<32x64xf32> -> vector<32x128xf32>
    %c0_41 = arith.constant 0 : index
    %c0_42 = arith.constant 0 : index
    %132 = vector.load %arg5[%c0_41, %c0_42] : memref<32x128xf32, #tpu.memory_space<vmem>>, vector<32x128xf32>
    tpu.vector_store %arg5[%c0_41, %c0_42], %131 {strides = array<i32>} : memref<32x128xf32, #tpu.memory_space<vmem>>, vector<32x128xf32>,
    return
  }
  func.func @transform_0(%arg0: i32) -> (i32, i32) {
    %c0_i32 = arith.constant 0 : i32
    %c0_i32_0 = arith.constant 0 : i32
    return %arg0, %c0_i32 : i32, i32
  }
  func.func @transform_1(%arg0: i32) -> (i32, i32) {
    %c0_i32 = arith.constant 0 : i32
    %c0_i32_0 = arith.constant 0 : i32
    %c0_i32_1 = arith.constant 0 : i32
    return %c0_i32, %c0_i32_0 : i32, i32
  }
  func.func @transform_2(%arg0: i32) -> (i32, i32) {
    %c0_i32 = arith.constant 0 : i32
    %c0_i32_0 = arith.constant 0 : i32
    %c0_i32_1 = arith.constant 0 : i32
    return %c0_i32, %c0_i32_0 : i32, i32
  }
  func.func @transform_3(%arg0: i32) -> (i32, i32) {
    %c0_i32 = arith.constant 0 : i32
    %c0_i32_0 = arith.constant 0 : i32
    %c0_i32_1 = arith.constant 0 : i32
    return %c0_i32, %c0_i32_0 : i32, i32
  }
  func.func @transform_4(%arg0: i32) -> (i32, i32) {
    %c0_i32 = arith.constant 0 : i32
    %c0_i32_0 = arith.constant 0 : i32
    return %arg0, %c0_i32 : i32, i32
  }
}

</mosaic_0001>

<llo_original>
// kernel: radial_func_forward.1
$region0: #{radial_func_forward.1}
  #allocation0 [shape = 'u32[]', space=smem, size = 0x4, offset = 0x4, fixed_abs, tag = 'smem constant byte address 0x4 - core index']
  #allocation1 [shape = 'u32[144,128]{1,0:T(1,128)}', space=vmem, size = 0x12000, scoped, tag = 'internal scratch']
  %s0 = inlined_call_operand.vmem [shape: f32[64,2], index: 0, kind: input, shape index: {}]
  %s1 = inlined_call_operand.vmem [shape: f32[7,32], index: 1, kind: input, shape index: {}]
  %s2 = inlined_call_operand.vmem [shape: f32[32,32], index: 2, kind: input, shape index: {}]
  %s3 = inlined_call_operand.vmem [shape: f32[33,64], index: 3, kind: input, shape index: {}]
  %s4 = inlined_call_operand.vmem [shape: f32[64,128], index: 4, kind: output, shape index: {}]
  %s5 = sld [smem:[#allocation0]]
  $region49: #{radial_func_forward.1} parent=0
    _
  %s7 = ssub.s32 1, %s5
  %s8 = scalar_select 0, %s7, %s5
  loop: start=0, step=1, limit=4
  $region2: #{radial_func_forward.1} parent=0 // loop_pre_header
    _
  $region3: #{radial_func_forward.1} parent=0 // loop_header
    %s10 = sphi 0, %s14
    %p11 = scmp.ge.s32.totalorder %s10, 4
    %s20 = sphi 0, %s22
    %s23 = sphi 0, %s20
    %s24 = sphi 0, %s23
    %s40 = sphi 0, %s24
    %s44 = sphi 0, %s44
    %s46 = sphi 0, %s44
    %s47 = sphi 0, %s46
    %s61 = sphi 0, %s47
    %s65 = sphi 0, %s65
    %s67 = sphi 0, %s65
    %s68 = sphi 0, %s67
    %s82 = sphi 0, %s68
    %s86 = sphi 0, %s86
    %s88 = sphi 0, %s86
    %s89 = sphi 0, %s88
    %s103 = sphi 0, %s89
    %s109 = sphi 0, %s111
    %s112 = sphi 0, %s109
    %s113 = sphi 0, %s112
    %s129 = sphi 0, %s113
  $region4: #{radial_func_forward.1} parent=0 // loop_header_branch
    %13 = sbr.rel (%p11) target = $region8
  $region5: #{radial_func_forward.1} parent=0 // loop_body
    %s15 = ssub.s32 %s10, 1
    %s16 = ssub.s32 %s10, 2
    %s17 = sadd.s32 %s10, 1
    %s18 = ssub.s32 %s10, %s17
    %p19 = scmp.eq.s32.totalorder %s18, 0
    %s21 = sadd.s32 %s20, 1
    %s22 = scalar_select %p19, %s20, %s21
    %p25 = pneg %p19
    %p26 = scmp.eq.s32.totalorder %s10, 1
    %p27 = por %p25, %p26
    %p28 = scmp.ne.s32.totalorder %s20, %s23
    %p29 = scmp.eq.s32.totalorder %s10, 0
    %p30 = por %p28, %p29
    %p31 = scmp.ne.s32.totalorder %s20, %s23
    %p32 = scmp.eq.s32.totalorder %s15, 1
    %p33 = por %p31, %p32
    %p34 = scmp.ne.s32.totalorder %s23, %s24
    %p35 = scmp.eq.s32.totalorder %s15, 0
    %p36 = por %p34, %p35
    %p37 = scmp.ne.s32.totalorder %s23, %s24
    %p38 = scmp.eq.s32.totalorder %s16, 1
    %p39 = por %p37, %p38
    %p41 = scmp.ne.s32.totalorder %s24, %s40
    %p42 = scmp.eq.s32.totalorder %s16, 0
    %p43 = por %p41, %p42
    %s45 = sadd.s32 %s44, 1
    %p48 = scmp.eq.s32.totalorder %s10, 1
    %p49 = scmp.ne.s32.totalorder %s44, %s46
    %p50 = scmp.eq.s32.totalorder %s10, 0
    %p51 = por %p49, %p50
    %p52 = scmp.ne.s32.totalorder %s44, %s46
    %p53 = scmp.eq.s32.totalorder %s15, 1
    %p54 = por %p52, %p53
    %p55 = scmp.ne.s32.totalorder %s46, %s47
    %p56 = scmp.eq.s32.totalorder %s15, 0
    %p57 = por %p55, %p56
    %p58 = scmp.ne.s32.totalorder %s46, %s47
    %p59 = scmp.eq.s32.totalorder %s16, 1
    %p60 = por %p58, %p59
    %p62 = scmp.ne.s32.totalorder %s47, %s61
    %p63 = scmp.eq.s32.totalorder %s16, 0
    %p64 = por %p62, %p63
    %s66 = sadd.s32 %s65, 1
    %p69 = scmp.eq.s32.totalorder %s10, 1
    %p70 = scmp.ne.s32.totalorder %s65, %s67
    %p71 = scmp.eq.s32.totalorder %s10, 0
    %p72 = por %p70, %p71
    %p73 = scmp.ne.s32.totalorder %s65, %s67
    %p74 = scmp.eq.s32.totalorder %s15, 1
    %p75 = por %p73, %p74
    %p76 = scmp.ne.s32.totalorder %s67, %s68
    %p77 = scmp.eq.s32.totalorder %s15, 0
    %p78 = por %p76, %p77
    %p79 = scmp.ne.s32.totalorder %s67, %s68
    %p80 = scmp.eq.s32.totalorder %s16, 1
    %p81 = por %p79, %p80
    %p83 = scmp.ne.s32.totalorder %s68, %s82
    %p84 = scmp.eq.s32.totalorder %s16, 0
    %p85 = por %p83, %p84
    %s87 = sadd.s32 %s86, 1
    %p90 = scmp.eq.s32.totalorder %s10, 1
    %p91 = scmp.ne.s32.totalorder %s86, %s88
    %p92 = scmp.eq.s32.totalorder %s10, 0
    %p93 = por %p91, %p92
    %p94 = scmp.ne.s32.totalorder %s86, %s88
    %p95 = scmp.eq.s32.totalorder %s15, 1
    %p96 = por %p94, %p95
    %p97 = scmp.ne.s32.totalorder %s88, %s89
    %p98 = scmp.eq.s32.totalorder %s15, 0
    %p99 = por %p97, %p98
    %p100 = scmp.ne.s32.totalorder %s88, %s89
    %p101 = scmp.eq.s32.totalorder %s16, 1
    %p102 = por %p100, %p101
    %p104 = scmp.ne.s32.totalorder %s89, %s103
    %p105 = scmp.eq.s32.totalorder %s16, 0
    %p106 = por %p104, %p105
    %s107 = ssub.s32 %s10, %s17
    %p108 = scmp.eq.s32.totalorder %s107, 0
    %s110 = sadd.s32 %s109, 1
    %s111 = scalar_select %p108, %s109, %s110
    %p114 = pneg %p108
    %p115 = scmp.eq.s32.totalorder %s10, 1
    %p116 = por %p114, %p115
    %p117 = scmp.ne.s32.totalorder %s109, %s112
    %p118 = scmp.eq.s32.totalorder %s10, 0
    %p119 = por %p117, %p118
    %p120 = scmp.ne.s32.totalorder %s109, %s112
    %p121 = scmp.eq.s32.totalorder %s15, 1
    %p122 = por %p120, %p121
    %p123 = scmp.ne.s32.totalorder %s112, %s113
    %p124 = scmp.eq.s32.totalorder %s15, 0
    %p125 = por %p123, %p124
    %p126 = scmp.ne.s32.totalorder %s112, %s113
    %p127 = scmp.eq.s32.totalorder %s16, 1
    %p128 = por %p126, %p127
    %p130 = scmp.ne.s32.totalorder %s113, %s129
    %p131 = scmp.eq.s32.totalorder %s16, 0
    %p132 = por %p130, %p131
    %p133 = scmp.le.s32.totalorder 1, %s10
    %p134 = scmp.lt.s32.totalorder %s10, 3
    %p135 = pnand %p133, %p134
    %p136 = pneg %p135
    // Predicated region
    $region9: #{radial_func_forward.1} parent=5 // pred_check
      _
    $region10: #{radial_func_forward.1} parent=5 // pred_check_branch
      %138 = sbr.rel (%p135) target = $region12
    $region11: #{radial_func_forward.1} parent=5 // pred_region
      %s139 = ssub.s32 %s10, 1
      // Predicated region
      $region13: #{radial_func_forward.1} parent=11 // pred_check
        %p140 = pneg %p57
      $region14: #{radial_func_forward.1} parent=11 // pred_check_branch
        %142 = sbr.rel (%p140) target = $region16
      $region15: #{radial_func_forward.1} parent=11 // pred_region
        _
      $region16: #{radial_func_forward.1} parent=11 // pred_fallthru
        _
      // Predicated region
      $region17: #{radial_func_forward.1} parent=11 // pred_check
        %p143 = pneg %p78
      $region18: #{radial_func_forward.1} parent=11 // pred_check_branch
        %145 = sbr.rel (%p143) target = $region20
      $region19: #{radial_func_forward.1} parent=11 // pred_region
        _
      $region20: #{radial_func_forward.1} parent=11 // pred_fallthru
        _
      // Predicated region
      $region21: #{radial_func_forward.1} parent=11 // pred_check
        %p146 = pneg %p99
      $region22: #{radial_func_forward.1} parent=11 // pred_check_branch
        %148 = sbr.rel (%p146) target = $region24
      $region23: #{radial_func_forward.1} parent=11 // pred_region
        _
      $region24: #{radial_func_forward.1} parent=11 // pred_fallthru
        _
    $region12: #{radial_func_forward.1} parent=5 // pred_fallthru
      _
    %p149 = scmp.lt.s32.totalorder %s10, 2
    // Predicated region
    $region25: #{radial_func_forward.1} parent=5 // pred_check
      %p150 = pneg %p149
    $region26: #{radial_func_forward.1} parent=5 // pred_check_branch
      %152 = sbr.rel (%p150) target = $region28
    $region27: #{radial_func_forward.1} parent=5 // pred_region
      // Predicated region
      $region29: #{radial_func_forward.1} parent=27 // pred_check
        %p153 = pneg %p30
      $region30: #{radial_func_forward.1} parent=27 // pred_check_branch
        %155 = sbr.rel (%p153) target = $region32
      $region31: #{radial_func_forward.1} parent=27 // pred_region
        %s156 = smul.u32 4, %s10
        %p157 = scmp.lt.s32.totalorder %s156, 7
        %s158 = scalar_select %p157, %s156, 7
        %s159 = smul.addr %s158, 8
        %s160 = scalar_lea.vmem %s0, %s159
        %s161 = smul.u32 4, %s10
      $region32: #{radial_func_forward.1} parent=27 // pred_fallthru
        _
    $region28: #{radial_func_forward.1} parent=5 // pred_fallthru
      _
    %p162 = scmp.le.s32.totalorder 1, %s10
    %p163 = scmp.lt.s32.totalorder %s10, 3
    %p164 = pnand %p162, %p163
    %p165 = pneg %p164
    // Predicated region
    $region33: #{radial_func_forward.1} parent=5 // pred_check
      _
    $region34: #{radial_func_forward.1} parent=5 // pred_check_branch
      %167 = sbr.rel (%p164) target = $region36
    $region35: #{radial_func_forward.1} parent=5 // pred_region
      %s168 = ssub.s32 %s10, 1
      %s169 = smul.u32 4, %s15
      %p170 = scmp.lt.s32.totalorder %s169, 7
      %s171 = scalar_select %p170, %s169, 7
      %s172 = smul.addr %s171, 8
      %s173 = scalar_lea.vmem %s0, %s172
      %p174 = pneg %p36
      %p175 = pneg %p33
      %p176 = pneg %p57
      %p177 = pneg %p54
      %p178 = pneg %p78
      %p179 = pneg %p75
      %p180 = pneg %p99
      %p181 = pneg %p96
      %p182 = pneg %p125
      %p183 = pneg %p122
      %s184 = smul.u32 4, %s15
      %p185 = scmp.lt.s32.totalorder %s184, 7
      %s186 = scalar_select %p185, %s184, 7
      %s187 = smul.addr %s186, 8
      %s188 = scalar_lea.vmem %s4, %s187
      %s189 = smul.u32 4, %s15
      %p190 = scmp.lt.s32.totalorder %s189, 7
      %s191 = scalar_select %p190, %s189, 7
      %s192 = smul.addr %s191, 8
      %s193 = scalar_lea.vmem %s0, %s192
      %s194 = smul.u32 4, %s15
      %s195 = smul.u32 4, %s15
      %p196 = scmp.lt.s32.totalorder %s195, 7
      %s197 = scalar_select %p196, %s195, 7
      %s198 = smul.addr %s197, 8
      %s199 = scalar_lea.vmem %s4, %s198
      %s200 = smul.u32 4, %s15
      %v201 = vld [vmem:[%s2] sm:$0xff]
      %v202 = vld [vmem:[%s2 + $0x8] sm:$0xff]
      %v203 = vld [vmem:[%s2 + $0x10] sm:$0xff]
      %v204 = vld [vmem:[%s2 + $0x18] sm:$0xff]
      %v205 = vld [vmem:[%s3] sm:$0xff]
      %v206 = vld [vmem:[%s3 + $0x8] sm:$0xff]
      %v207 = vld [vmem:[%s3 + $0x10] sm:$0xff]
      %v208 = vld [vmem:[%s3 + $0x18] sm:$0xff]
      %v209 = vld [vmem:[%s3 + $0x20] sm:$0x1]
      %v210 = vld [vmem:[%s1] sm:$0x1]
      %v211 = vld [vmem:[%s1 + $0x1] sm:$0x1]
      %v212 = vld [vmem:[%s1 + $0x2] sm:$0x1]
      %v213 = vld [vmem:[%s1 + $0x3] sm:$0x1]
      %v214 = vld [vmem:[%s1 + $0x4] sm:$0x1]
      %v215 = vld [vmem:[%s1 + $0x5] sm:$0x1]
      %v216 = vld [vmem:[%s1 + $0x6] sm:$0x1]
      %v217 = vld [vmem:[%s193] sm:$0xff]
      %v218 = vld [vmem:[%s193 + $0x8] sm:$0xff]
      %v219 = vld [vmem:[%s193 + $0x10] sm:$0xff]
      %v220 = vld [vmem:[%s193 + $0x18] sm:$0xff]
      %222 = vset.pattern.permute.xlu0 0
      %223 = vperm.xlu0 %222, %v217
      %v224 = vpop.permute.xlu0 %223
      %227 = vset.pattern.permute.xlu0 0
      %228 = vperm.xlu0 %227, %v218
      %v229 = vpop.permute.xlu0 %228
      %232 = vset.pattern.permute.xlu0 0
      %233 = vperm.xlu0 %232, %v219
      %v234 = vpop.permute.xlu0 %233
      %237 = vset.pattern.permute.xlu0 0
      %238 = vperm.xlu0 %237, %v220
      %v239 = vpop.permute.xlu0 %238
      %v241 = vlaneseq
      %v242 = vshrl.u32 %v241, 7
      %v243 = vsub.s32 0, %v242
      %v244 = vrot.slane %v210, %v243
      %v245 = vmul.f32 %v224, %v244
      %v246 = vmul.f32 %v229, %v244
      %v247 = vmul.f32 %v234, %v244
      %v248 = vmul.f32 %v239, %v244
      %v249 = vlaneseq
      %v250 = vshrl.u32 %v249, 7
      %v251 = vsub.s32 0, %v250
      %v252 = vrot.slane %v211, %v251
      %v253 = vadd.f32 %v245, %v252
      %v254 = vadd.f32 %v246, %v252
      %v255 = vadd.f32 %v247, %v252
      %v256 = vadd.f32 %v248, %v252
      %vm257 = vcmask 261120
      %v258 = vsel %vm257, %v253, 0.0
      %259 = vadd.xlane.f32.xlu0 %v258
      %v260 = vpop.xlane.xlu0 %259
      %v261 = vsel %vm257, %v254, 0.0
      %262 = vadd.xlane.f32.xlu0 %v261
      %v263 = vpop.xlane.xlu0 %262
      %v264 = vsel %vm257, %v255, 0.0
      %265 = vadd.xlane.f32.xlu0 %v264
      %v266 = vpop.xlane.xlu0 %265
      %v267 = vsel %vm257, %v256, 0.0
      %268 = vadd.xlane.f32.xlu0 %v267
      %v269 = vpop.xlane.xlu0 %268
      %v270 = vrcp.pop 32.0
      %v271 = vmul.f32 %v260, %v270
      %v272 = vmul.f32 %v263, %v270
      %v273 = vmul.f32 %v266, %v270
      %v274 = vmul.f32 %v269, %v270
      %v275 = vsub.f32 %v253, %v271
      %v276 = vsub.f32 %v254, %v272
      %v277 = vsub.f32 %v255, %v273
      %v278 = vsub.f32 %v256, %v274
      %v279 = vmul.f32 %v275, %v275
      %v280 = vmul.f32 %v276, %v276
      %v281 = vmul.f32 %v277, %v277
      %v282 = vmul.f32 %v278, %v278
      %v283 = vsel %vm257, %v279, 0.0
      %284 = vadd.xlane.f32.xlu0 %v283
      %v285 = vpop.xlane.xlu0 %284
      %v286 = vsel %vm257, %v280, 0.0
      %287 = vadd.xlane.f32.xlu0 %v286
      %v288 = vpop.xlane.xlu0 %287
      %v289 = vsel %vm257, %v281, 0.0
      %290 = vadd.xlane.f32.xlu0 %v289
      %v291 = vpop.xlane.xlu0 %290
      %v292 = vsel %vm257, %v282, 0.0
      %293 = vadd.xlane.f32.xlu0 %v292
      %v294 = vpop.xlane.xlu0 %293
      %v295 = vmul.f32 %v285, %v270
      %v296 = vmul.f32 %v288, %v270
      %v297 = vmul.f32 %v291, %v270
      %v298 = vmul.f32 %v294, %v270
      %v299 = vadd.f32 %v295, 1e-05
      %v300 = vadd.f32 %v296, 1e-05
      %v301 = vadd.f32 %v297, 1e-05
      %v302 = vadd.f32 %v298, 1e-05
      %v303 = vrsqrt.pop %v299
      %v304 = vrsqrt.pop %v300
      %v305 = vrsqrt.pop %v301
      %v306 = vrsqrt.pop %v302
      %v307 = vmul.f32 %v275, %v303
      %v308 = vmul.f32 %v276, %v304
      %v309 = vmul.f32 %v277, %v305
      %v310 = vmul.f32 %v278, %v306
      %v311 = vlaneseq
      %v312 = vshrl.u32 %v311, 7
      %v313 = vsub.s32 0, %v312
      %v314 = vrot.slane %v212, %v313
      %v315 = vmul.f32 %v307, %v314
      %v316 = vmul.f32 %v308, %v314
      %v317 = vmul.f32 %v309, %v314
      %v318 = vmul.f32 %v310, %v314
      %v319 = vlaneseq
      %v320 = vshrl.u32 %v319, 7
      %v321 = vsub.s32 0, %v320
      %v322 = vrot.slane %v213, %v321
      %v323 = vadd.f32 %v315, %v322
      %v324 = vadd.f32 %v316, %v322
      %v325 = vadd.f32 %v317, %v322
      %v326 = vadd.f32 %v318, %v322
      %v327 = vmax.f32 %v323, 0.0
      %v328 = vmax.f32 %v324, 0.0
      %v329 = vmax.f32 %v325, 0.0
      %v330 = vmax.f32 %v326, 0.0
      %v331 = vlaneseq
      %v332 = vshrl.u32 %v331, 7
      %v333 = vsub.s32 0, %v332
      %v334 = vrot.slane %v214, %v333
      %v336 = vsel %vm257, %v327, 0
      %v339 = vsel %vm257, %v328, 0
      %v342 = vsel %vm257, %v329, 0
      %v345 = vsel %vm257, %v330, 0
      %347 = vmatprep.subr.mxu0 0.0
      %348 = vmatpush1.msra.mxu0 %v201
      %349 = vmatprep.subr.mxu0 0.0
      %350 = vmatpush1.msra.mxu0 %v202
      %351 = vmatprep.subr.mxu0 0.0
      %352 = vmatpush1.msra.mxu0 %v203
      %353 = vmatprep.subr.mxu0 0.0
      %354 = vmatpush1.msra.mxu0 %v204
      %355 = vmatprep.subr.mxu0 0.0
      %356 = vmatpush1.msra.mxu0 0.0
      %357 = vmatprep.subr.mxu0 0.0
      %358 = vmatpush1.msra.mxu0 0.0
      %359 = vmatprep.subr.mxu0 0.0
      %360 = vmatpush1.msra.mxu0 0.0
      %361 = vmatprep.subr.mxu0 0.0
      %362 = vmatpush1.msra.mxu0 0.0
      %363 = vmatprep.subr.mxu0 0.0
      %364 = vmatpush1.msra.mxu0 0.0
      %365 = vmatprep.subr.mxu0 0.0
      %366 = vmatpush1.msra.mxu0 0.0
      %367 = vmatprep.subr.mxu0 0.0
      %368 = vmatpush1.msra.mxu0 0.0
      %369 = vmatprep.subr.mxu0 0.0
      %370 = vmatpush1.msra.mxu0 0.0
      %371 = vmatprep.subr.mxu0 0.0
      %372 = vmatpush1.msra.mxu0 0.0
      %373 = vmatprep.subr.mxu0 0.0
      %374 = vmatpush1.msra.mxu0 0.0
      %375 = vmatprep.subr.mxu0 0.0
      %376 = vmatpush1.msra.mxu0 0.0
      %377 = vmatprep.subr.mxu0 0.0
      %378 = vmatpush1.msra.mxu0 0.0
      %379 = vmatprep.subr.mxu0 0.0
      %380 = vmatpush1.msra.mxu0 0.0
      %381 = vmatprep.subr.mxu0 0.0
      %382 = vmatpush1.msra.mxu0 0.0
      %383 = vmatprep.subr.mxu0 0.0
      %384 = vmatpush1.msra.mxu0 0.0
      %385 = vmatprep.subr.mxu0 0.0
      %386 = vmatpush1.msra.mxu0 0.0
      %387 = vmatprep.subr.mxu0 0.0
      %388 = vmatpush1.msra.mxu0 0.0
      %389 = vmatprep.subr.mxu0 0.0
      %390 = vmatpush1.msra.mxu0 0.0
      %391 = vmatprep.subr.mxu0 0.0
      %392 = vmatpush1.msra.mxu0 0.0
      %393 = vmatprep.subr.mxu0 0.0
      %394 = vmatpush1.msra.mxu0 0.0
      %395 = vmatprep.subr.mxu0 0.0
      %396 = vmatpush1.msra.mxu0 0.0
      %397 = vmatprep.subr.mxu0 0.0
      %398 = vmatpush1.msra.mxu0 0.0
      %399 = vmatprep.subr.mxu0 0.0
      %400 = vmatpush1.msra.mxu0 0.0
      %401 = vmatprep.subr.mxu0 0.0
      %402 = vmatpush1.msra.mxu0 0.0
      %403 = vmatprep.subr.mxu0 0.0
      %404 = vmatpush1.msra.mxu0 0.0
      %405 = vmatprep.subr.mxu0 0.0
      %406 = vmatpush1.msra.mxu0 0.0
      %407 = vmatprep.subr.mxu0 0.0
      %408 = vmatpush1.msra.mxu0 0.0
      %409 = vmatprep.subr.mxu0 0.0
      %410 = vmatpush1.msra.mxu0 0.0
      %411 = vmatprep.mubr.f32.mxu0 0.0
      %412 = vmatmul.mubr.f32.gmra.mrb[0].mxu0 %v336
      %v413 = vpop.f32.mrb[0].mxu0
      %v414 = vadd.f32 %v334, %v413
      %v415 = vpop.f32.mrb[0].mxu0
      %416 = vmatprep.mubr.f32.mxu0 0.0
      %417 = vmatmul.mubr.f32.gmra.mrb[0].mxu0 %v339
      %v418 = vpop.f32.mrb[0].mxu0
      %v419 = vadd.f32 %v334, %v418
      %v420 = vpop.f32.mrb[0].mxu0
      %421 = vmatprep.mubr.f32.mxu0 0.0
      %422 = vmatmul.mubr.f32.gmra.mrb[0].mxu0 %v342
      %v423 = vpop.f32.mrb[0].mxu0
      %v424 = vadd.f32 %v334, %v423
      %v425 = vpop.f32.mrb[0].mxu0
      %426 = vmatprep.mubr.f32.mxu0 0.0
      %427 = vmatmul.mubr.f32.gmra.mrb[0].mxu0 %v345
      %v428 = vpop.f32.mrb[0].mxu0
      %v429 = vadd.f32 %v334, %v428
      %v430 = vpop.f32.mrb[0].mxu0
      %431 = vdwg.mxu0
      %v432 = vsel %vm257, %v414, 0.0
      %433 = vadd.xlane.f32.xlu0 %v432
      %v434 = vpop.xlane.xlu0 %433
      %v435 = vsel %vm257, %v419, 0.0
      %436 = vadd.xlane.f32.xlu0 %v435
      %v437 = vpop.xlane.xlu0 %436
      %v438 = vsel %vm257, %v424, 0.0
      %439 = vadd.xlane.f32.xlu0 %v438
      %v440 = vpop.xlane.xlu0 %439
      %v441 = vsel %vm257, %v429, 0.0
      %442 = vadd.xlane.f32.xlu0 %v441
      %v443 = vpop.xlane.xlu0 %442
      %v444 = vmul.f32 %v434, %v270
      %v445 = vmul.f32 %v437, %v270
      %v446 = vmul.f32 %v440, %v270
      %v447 = vmul.f32 %v443, %v270
      %v448 = vsub.f32 %v414, %v444
      %v449 = vsub.f32 %v419, %v445
      %v450 = vsub.f32 %v424, %v446
      %v451 = vsub.f32 %v429, %v447
      %v452 = vmul.f32 %v448, %v448
      %v453 = vmul.f32 %v449, %v449
      %v454 = vmul.f32 %v450, %v450
      %v455 = vmul.f32 %v451, %v451
      %v456 = vsel %vm257, %v452, 0.0
      %457 = vadd.xlane.f32.xlu0 %v456
      %v458 = vpop.xlane.xlu0 %457
      %v459 = vsel %vm257, %v453, 0.0
      %460 = vadd.xlane.f32.xlu0 %v459
      %v461 = vpop.xlane.xlu0 %460
      %v462 = vsel %vm257, %v454, 0.0
      %463 = vadd.xlane.f32.xlu0 %v462
      %v464 = vpop.xlane.xlu0 %463
      %v465 = vsel %vm257, %v455, 0.0
      %466 = vadd.xlane.f32.xlu0 %v465
      %v467 = vpop.xlane.xlu0 %466
      %v468 = vmul.f32 %v458, %v270
      %v469 = vmul.f32 %v461, %v270
      %v470 = vmul.f32 %v464, %v270
      %v471 = vmul.f32 %v467, %v270
      %v472 = vadd.f32 %v468, 1e-05
      %v473 = vadd.f32 %v469, 1e-05
      %v474 = vadd.f32 %v470, 1e-05
      %v475 = vadd.f32 %v471, 1e-05
      %v476 = vrsqrt.pop %v472
      %v477 = vrsqrt.pop %v473
      %v478 = vrsqrt.pop %v474
      %v479 = vrsqrt.pop %v475
      %v480 = vmul.f32 %v448, %v476
      %v481 = vmul.f32 %v449, %v477
      %v482 = vmul.f32 %v450, %v478
      %v483 = vmul.f32 %v451, %v479
      %v484 = vlaneseq
      %v485 = vshrl.u32 %v484, 7
      %v486 = vsub.s32 0, %v485
      %v487 = vrot.slane %v215, %v486
      %v488 = vmul.f32 %v480, %v487
      %v489 = vmul.f32 %v481, %v487
      %v490 = vmul.f32 %v482, %v487
      %v491 = vmul.f32 %v483, %v487
      %v492 = vlaneseq
      %v493 = vshrl.u32 %v492, 7
      %v494 = vsub.s32 0, %v493
      %v495 = vrot.slane %v216, %v494
      %v496 = vadd.f32 %v488, %v495
      %v497 = vadd.f32 %v489, %v495
      %v498 = vadd.f32 %v490, %v495
      %v499 = vadd.f32 %v491, %v495
      %v500 = vmax.f32 %v496, 0.0
      %v501 = vmax.f32 %v497, 0.0
      %v502 = vmax.f32 %v498, 0.0
      %v503 = vmax.f32 %v499, 0.0
      %v504 = vlaneseq
      %v505 = vshrl.u32 %v504, 7
      %v506 = vsub.s32 0, %v505
      %v507 = vrot.slane %v209, %v506
      %v509 = vsel %vm257, %v500, 0
      %v512 = vsel %vm257, %v501, 0
      %v515 = vsel %vm257, %v502, 0
      %v518 = vsel %vm257, %v503, 0
      %520 = vmatprep.subr.mxu0 0.0
      %521 = vmatpush1.msra.mxu0 %v205
      %522 = vmatprep.subr.mxu0 0.0
      %523 = vmatpush1.msra.mxu0 %v206
      %524 = vmatprep.subr.mxu0 0.0
      %525 = vmatpush1.msra.mxu0 %v207
      %526 = vmatprep.subr.mxu0 0.0
      %527 = vmatpush1.msra.mxu0 %v208
      %528 = vmatprep.subr.mxu0 0.0
      %529 = vmatpush1.msra.mxu0 0.0
      %530 = vmatprep.subr.mxu0 0.0
      %531 = vmatpush1.msra.mxu0 0.0
      %532 = vmatprep.subr.mxu0 0.0
      %533 = vmatpush1.msra.mxu0 0.0
      %534 = vmatprep.subr.mxu0 0.0
      %535 = vmatpush1.msra.mxu0 0.0
      %536 = vmatprep.subr.mxu0 0.0
      %537 = vmatpush1.msra.mxu0 0.0
      %538 = vmatprep.subr.mxu0 0.0
      %539 = vmatpush1.msra.mxu0 0.0
      %540 = vmatprep.subr.mxu0 0.0
      %541 = vmatpush1.msra.mxu0 0.0
      %542 = vmatprep.subr.mxu0 0.0
      %543 = vmatpush1.msra.mxu0 0.0
      %544 = vmatprep.subr.mxu0 0.0
      %545 = vmatpush1.msra.mxu0 0.0
      %546 = vmatprep.subr.mxu0 0.0
      %547 = vmatpush1.msra.mxu0 0.0
      %548 = vmatprep.subr.mxu0 0.0
      %549 = vmatpush1.msra.mxu0 0.0
      %550 = vmatprep.subr.mxu0 0.0
      %551 = vmatpush1.msra.mxu0 0.0
      %552 = vmatprep.subr.mxu0 0.0
      %553 = vmatpush1.msra.mxu0 0.0
      %554 = vmatprep.subr.mxu0 0.0
      %555 = vmatpush1.msra.mxu0 0.0
      %556 = vmatprep.subr.mxu0 0.0
      %557 = vmatpush1.msra.mxu0 0.0
      %558 = vmatprep.subr.mxu0 0.0
      %559 = vmatpush1.msra.mxu0 0.0
      %560 = vmatprep.subr.mxu0 0.0
      %561 = vmatpush1.msra.mxu0 0.0
      %562 = vmatprep.subr.mxu0 0.0
      %563 = vmatpush1.msra.mxu0 0.0
      %564 = vmatprep.subr.mxu0 0.0
      %565 = vmatpush1.msra.mxu0 0.0
      %566 = vmatprep.subr.mxu0 0.0
      %567 = vmatpush1.msra.mxu0 0.0
      %568 = vmatprep.subr.mxu0 0.0
      %569 = vmatpush1.msra.mxu0 0.0
      %570 = vmatprep.subr.mxu0 0.0
      %571 = vmatpush1.msra.mxu0 0.0
      %572 = vmatprep.subr.mxu0 0.0
      %573 = vmatpush1.msra.mxu0 0.0
      %574 = vmatprep.subr.mxu0 0.0
      %575 = vmatpush1.msra.mxu0 0.0
      %576 = vmatprep.subr.mxu0 0.0
      %577 = vmatpush1.msra.mxu0 0.0
      %578 = vmatprep.subr.mxu0 0.0
      %579 = vmatpush1.msra.mxu0 0.0
      %580 = vmatprep.subr.mxu0 0.0
      %581 = vmatpush1.msra.mxu0 0.0
      %582 = vmatprep.subr.mxu0 0.0
      %583 = vmatpush1.msra.mxu0 0.0
      %584 = vmatprep.mubr.f32.mxu0 0.0
      %585 = vmatmul.mubr.f32.gmra.mrb[0].mxu0 %v509
      %v586 = vpop.f32.mrb[0].mxu0
      %v587 = vadd.f32 %v507, %v586
      %v588 = vpop.f32.mrb[0].mxu0
      %589 = vmatprep.mubr.f32.mxu0 0.0
      %590 = vmatmul.mubr.f32.gmra.mrb[0].mxu0 %v512
      %v591 = vpop.f32.mrb[0].mxu0
      %v592 = vadd.f32 %v507, %v591
      %v593 = vpop.f32.mrb[0].mxu0
      %594 = vmatprep.mubr.f32.mxu0 0.0
      %595 = vmatmul.mubr.f32.gmra.mrb[0].mxu0 %v515
      %v596 = vpop.f32.mrb[0].mxu0
      %v597 = vadd.f32 %v507, %v596
      %v598 = vpop.f32.mrb[0].mxu0
      %599 = vmatprep.mubr.f32.mxu0 0.0
      %600 = vmatmul.mubr.f32.gmra.mrb[0].mxu0 %v518
      %v601 = vpop.f32.mrb[0].mxu0
      %v602 = vadd.f32 %v507, %v601
      %v603 = vpop.f32.mrb[0].mxu0
      %604 = vdwg.mxu0
      %605 = vset.pattern.permute.xlu0 1
      %606 = vperm.xlu0 %605, %v217
      %v607 = vpop.permute.xlu0 %606
      %609 = vset.pattern.permute.xlu0 1
      %610 = vperm.xlu0 %609, %v218
      %v611 = vpop.permute.xlu0 %610
      %613 = vset.pattern.permute.xlu0 1
      %614 = vperm.xlu0 %613, %v219
      %v615 = vpop.permute.xlu0 %614
      %617 = vset.pattern.permute.xlu0 1
      %618 = vperm.xlu0 %617, %v220
      %v619 = vpop.permute.xlu0 %618
      %v621 = vmul.f32 %v607, %v244
      %v622 = vmul.f32 %v611, %v244
      %v623 = vmul.f32 %v615, %v244
      %v624 = vmul.f32 %v619, %v244
      %v625 = vadd.f32 %v621, %v252
      %v626 = vadd.f32 %v622, %v252
      %v627 = vadd.f32 %v623, %v252
      %v628 = vadd.f32 %v624, %v252
      %v629 = vsel %vm257, %v625, 0.0
      %630 = vadd.xlane.f32.xlu0 %v629
      %v631 = vpop.xlane.xlu0 %630
      %v632 = vsel %vm257, %v626, 0.0
      %633 = vadd.xlane.f32.xlu0 %v632
      %v634 = vpop.xlane.xlu0 %633
      %v635 = vsel %vm257, %v627, 0.0
      %636 = vadd.xlane.f32.xlu0 %v635
      %v637 = vpop.xlane.xlu0 %636
      %v638 = vsel %vm257, %v628, 0.0
      %639 = vadd.xlane.f32.xlu0 %v638
      %v640 = vpop.xlane.xlu0 %639
      %v641 = vmul.f32 %v631, %v270
      %v642 = vmul.f32 %v634, %v270
      %v643 = vmul.f32 %v637, %v270
      %v644 = vmul.f32 %v640, %v270
      %v645 = vsub.f32 %v625, %v641
      %v646 = vsub.f32 %v626, %v642
      %v647 = vsub.f32 %v627, %v643
      %v648 = vsub.f32 %v628, %v644
      %v649 = vmul.f32 %v645, %v645
      %v650 = vmul.f32 %v646, %v646
      %v651 = vmul.f32 %v647, %v647
      %v652 = vmul.f32 %v648, %v648
      %v653 = vsel %vm257, %v649, 0.0
      %654 = vadd.xlane.f32.xlu0 %v653
      %v655 = vpop.xlane.xlu0 %654
      %v656 = vsel %vm257, %v650, 0.0
      %657 = vadd.xlane.f32.xlu0 %v656
      %v658 = vpop.xlane.xlu0 %657
      %v659 = vsel %vm257, %v651, 0.0
      %660 = vadd.xlane.f32.xlu0 %v659
      %v661 = vpop.xlane.xlu0 %660
      %v662 = vsel %vm257, %v652, 0.0
      %663 = vadd.xlane.f32.xlu0 %v662
      %v664 = vpop.xlane.xlu0 %663
      %v665 = vmul.f32 %v655, %v270
      %v666 = vmul.f32 %v658, %v270
      %v667 = vmul.f32 %v661, %v270
      %v668 = vmul.f32 %v664, %v270
      %v669 = vadd.f32 %v665, 1e-05
      %v670 = vadd.f32 %v666, 1e-05
      %v671 = vadd.f32 %v667, 1e-05
      %v672 = vadd.f32 %v668, 1e-05
      %v673 = vrsqrt.pop %v669
      %v674 = vrsqrt.pop %v670
      %v675 = vrsqrt.pop %v671
      %v676 = vrsqrt.pop %v672
      %v677 = vmul.f32 %v645, %v673
      %v678 = vmul.f32 %v646, %v674
      %v679 = vmul.f32 %v647, %v675
      %v680 = vmul.f32 %v648, %v676
      %v681 = vmul.f32 %v677, %v314
      %v682 = vmul.f32 %v678, %v314
      %v683 = vmul.f32 %v679, %v314
      %v684 = vmul.f32 %v680, %v314
      %v685 = vadd.f32 %v681, %v322
      %v686 = vadd.f32 %v682, %v322
      %v687 = vadd.f32 %v683, %v322
      %v688 = vadd.f32 %v684, %v322
      %v689 = vmax.f32 %v685, 0.0
      %v690 = vmax.f32 %v686, 0.0
      %v691 = vmax.f32 %v687, 0.0
      %v692 = vmax.f32 %v688, 0.0
      %v694 = vsel %vm257, %v689, 0
      %v697 = vsel %vm257, %v690, 0
      %v700 = vsel %vm257, %v691, 0
      %v703 = vsel %vm257, %v692, 0
      %705 = vmatprep.subr.mxu0 0.0
      %706 = vmatpush1.msra.mxu0 %v201
      %707 = vmatprep.subr.mxu0 0.0
      %708 = vmatpush1.msra.mxu0 %v202
      %709 = vmatprep.subr.mxu0 0.0
      %710 = vmatpush1.msra.mxu0 %v203
      %711 = vmatprep.subr.mxu0 0.0
      %712 = vmatpush1.msra.mxu0 %v204
      %713 = vmatprep.subr.mxu0 0.0
      %714 = vmatpush1.msra.mxu0 0.0
      %715 = vmatprep.subr.mxu0 0.0
      %716 = vmatpush1.msra.mxu0 0.0
      %717 = vmatprep.subr.mxu0 0.0
      %718 = vmatpush1.msra.mxu0 0.0
      %719 = vmatprep.subr.mxu0 0.0
      %720 = vmatpush1.msra.mxu0 0.0
      %721 = vmatprep.subr.mxu0 0.0
      %722 = vmatpush1.msra.mxu0 0.0
      %723 = vmatprep.subr.mxu0 0.0
      %724 = vmatpush1.msra.mxu0 0.0
      %725 = vmatprep.subr.mxu0 0.0
      %726 = vmatpush1.msra.mxu0 0.0
      %727 = vmatprep.subr.mxu0 0.0
      %728 = vmatpush1.msra.mxu0 0.0
      %729 = vmatprep.subr.mxu0 0.0
      %730 = vmatpush1.msra.mxu0 0.0
      %731 = vmatprep.subr.mxu0 0.0
      %732 = vmatpush1.msra.mxu0 0.0
      %733 = vmatprep.subr.mxu0 0.0
      %734 = vmatpush1.msra.mxu0 0.0
      %735 = vmatprep.subr.mxu0 0.0
      %736 = vmatpush1.msra.mxu0 0.0
      %737 = vmatprep.subr.mxu0 0.0
      %738 = vmatpush1.msra.mxu0 0.0
      %739 = vmatprep.subr.mxu0 0.0
      %740 = vmatpush1.msra.mxu0 0.0
      %741 = vmatprep.subr.mxu0 0.0
      %742 = vmatpush1.msra.mxu0 0.0
      %743 = vmatprep.subr.mxu0 0.0
      %744 = vmatpush1.msra.mxu0 0.0
      %745 = vmatprep.subr.mxu0 0.0
      %746 = vmatpush1.msra.mxu0 0.0
      %747 = vmatprep.subr.mxu0 0.0
      %748 = vmatpush1.msra.mxu0 0.0
      %749 = vmatprep.subr.mxu0 0.0
      %750 = vmatpush1.msra.mxu0 0.0
      %751 = vmatprep.subr.mxu0 0.0
      %752 = vmatpush1.msra.mxu0 0.0
      %753 = vmatprep.subr.mxu0 0.0
      %754 = vmatpush1.msra.mxu0 0.0
      %755 = vmatprep.subr.mxu0 0.0
      %756 = vmatpush1.msra.mxu0 0.0
      %757 = vmatprep.subr.mxu0 0.0
      %758 = vmatpush1.msra.mxu0 0.0
      %759 = vmatprep.subr.mxu0 0.0
      %760 = vmatpush1.msra.mxu0 0.0
      %761 = vmatprep.subr.mxu0 0.0
      %762 = vmatpush1.msra.mxu0 0.0
      %763 = vmatprep.subr.mxu0 0.0
      %764 = vmatpush1.msra.mxu0 0.0
      %765 = vmatprep.subr.mxu0 0.0
      %766 = vmatpush1.msra.mxu0 0.0
      %767 = vmatprep.subr.mxu0 0.0
      %768 = vmatpush1.msra.mxu0 0.0
      %769 = vmatprep.mubr.f32.mxu0 0.0
      %770 = vmatmul.mubr.f32.gmra.mrb[0].mxu0 %v694
      %v771 = vpop.f32.mrb[0].mxu0
      %v772 = vadd.f32 %v334, %v771
      %v773 = vpop.f32.mrb[0].mxu0
      %774 = vmatprep.mubr.f32.mxu0 0.0
      %775 = vmatmul.mubr.f32.gmra.mrb[0].mxu0 %v697
      %v776 = vpop.f32.mrb[0].mxu0
      %v777 = vadd.f32 %v334, %v776
      %v778 = vpop.f32.mrb[0].mxu0
      %779 = vmatprep.mubr.f32.mxu0 0.0
      %780 = vmatmul.mubr.f32.gmra.mrb[0].mxu0 %v700
      %v781 = vpop.f32.mrb[0].mxu0
      %v782 = vadd.f32 %v334, %v781
      %v783 = vpop.f32.mrb[0].mxu0
      %784 = vmatprep.mubr.f32.mxu0 0.0
      %785 = vmatmul.mubr.f32.gmra.mrb[0].mxu0 %v703
      %v786 = vpop.f32.mrb[0].mxu0
      %v787 = vadd.f32 %v334, %v786
      %v788 = vpop.f32.mrb[0].mxu0
      %789 = vdwg.mxu0
      %v790 = vsel %vm257, %v772, 0.0
      %791 = vadd.xlane.f32.xlu0 %v790
      %v792 = vpop.xlane.xlu0 %791
      %v793 = vsel %vm257, %v777, 0.0
      %794 = vadd.xlane.f32.xlu0 %v793
      %v795 = vpop.xlane.xlu0 %794
      %v796 = vsel %vm257, %v782, 0.0
      %797 = vadd.xlane.f32.xlu0 %v796
      %v798 = vpop.xlane.xlu0 %797
      %v799 = vsel %vm257, %v787, 0.0
      %800 = vadd.xlane.f32.xlu0 %v799
      %v801 = vpop.xlane.xlu0 %800
      %v802 = vmul.f32 %v792, %v270
      %v803 = vmul.f32 %v795, %v270
      %v804 = vmul.f32 %v798, %v270
      %v805 = vmul.f32 %v801, %v270
      %v806 = vsub.f32 %v772, %v802
      %v807 = vsub.f32 %v777, %v803
      %v808 = vsub.f32 %v782, %v804
      %v809 = vsub.f32 %v787, %v805
      %v810 = vmul.f32 %v806, %v806
      %v811 = vmul.f32 %v807, %v807
      %v812 = vmul.f32 %v808, %v808
      %v813 = vmul.f32 %v809, %v809
      %v814 = vsel %vm257, %v810, 0.0
      %815 = vadd.xlane.f32.xlu0 %v814
      %v816 = vpop.xlane.xlu0 %815
      %v817 = vsel %vm257, %v811, 0.0
      %818 = vadd.xlane.f32.xlu0 %v817
      %v819 = vpop.xlane.xlu0 %818
      %v820 = vsel %vm257, %v812, 0.0
      %821 = vadd.xlane.f32.xlu0 %v820
      %v822 = vpop.xlane.xlu0 %821
      %v823 = vsel %vm257, %v813, 0.0
      %824 = vadd.xlane.f32.xlu0 %v823
      %v825 = vpop.xlane.xlu0 %824
      %v826 = vmul.f32 %v816, %v270
      %v827 = vmul.f32 %v819, %v270
      %v828 = vmul.f32 %v822, %v270
      %v829 = vmul.f32 %v825, %v270
      %v830 = vadd.f32 %v826, 1e-05
      %v831 = vadd.f32 %v827, 1e-05
      %v832 = vadd.f32 %v828, 1e-05
      %v833 = vadd.f32 %v829, 1e-05
      %v834 = vrsqrt.pop %v830
      %v835 = vrsqrt.pop %v831
      %v836 = vrsqrt.pop %v832
      %v837 = vrsqrt.pop %v833
      %v838 = vmul.f32 %v806, %v834
      %v839 = vmul.f32 %v807, %v835
      %v840 = vmul.f32 %v808, %v836
      %v841 = vmul.f32 %v809, %v837
      %v842 = vmul.f32 %v838, %v487
      %v843 = vmul.f32 %v839, %v487
      %v844 = vmul.f32 %v840, %v487
      %v845 = vmul.f32 %v841, %v487
      %v846 = vadd.f32 %v842, %v495
      %v847 = vadd.f32 %v843, %v495
      %v848 = vadd.f32 %v844, %v495
      %v849 = vadd.f32 %v845, %v495
      %v850 = vmax.f32 %v846, 0.0
      %v851 = vmax.f32 %v847, 0.0
      %v852 = vmax.f32 %v848, 0.0
      %v853 = vmax.f32 %v849, 0.0
      %v855 = vsel %vm257, %v850, 0
      %v858 = vsel %vm257, %v851, 0
      %v861 = vsel %vm257, %v852, 0
      %v864 = vsel %vm257, %v853, 0
      %866 = vmatprep.subr.mxu0 0.0
      %867 = vmatpush1.msra.mxu0 %v205
      %868 = vmatprep.subr.mxu0 0.0
      %869 = vmatpush1.msra.mxu0 %v206
      %870 = vmatprep.subr.mxu0 0.0
      %871 = vmatpush1.msra.mxu0 %v207
      %872 = vmatprep.subr.mxu0 0.0
      %873 = vmatpush1.msra.mxu0 %v208
      %874 = vmatprep.subr.mxu0 0.0
      %875 = vmatpush1.msra.mxu0 0.0
      %876 = vmatprep.subr.mxu0 0.0
      %877 = vmatpush1.msra.mxu0 0.0
      %878 = vmatprep.subr.mxu0 0.0
      %879 = vmatpush1.msra.mxu0 0.0
      %880 = vmatprep.subr.mxu0 0.0
      %881 = vmatpush1.msra.mxu0 0.0
      %882 = vmatprep.subr.mxu0 0.0
      %883 = vmatpush1.msra.mxu0 0.0
      %884 = vmatprep.subr.mxu0 0.0
      %885 = vmatpush1.msra.mxu0 0.0
      %886 = vmatprep.subr.mxu0 0.0
      %887 = vmatpush1.msra.mxu0 0.0
      %888 = vmatprep.subr.mxu0 0.0
      %889 = vmatpush1.msra.mxu0 0.0
      %890 = vmatprep.subr.mxu0 0.0
      %891 = vmatpush1.msra.mxu0 0.0
      %892 = vmatprep.subr.mxu0 0.0
      %893 = vmatpush1.msra.mxu0 0.0
      %894 = vmatprep.subr.mxu0 0.0
      %895 = vmatpush1.msra.mxu0 0.0
      %896 = vmatprep.subr.mxu0 0.0
      %897 = vmatpush1.msra.mxu0 0.0
      %898 = vmatprep.subr.mxu0 0.0
      %899 = vmatpush1.msra.mxu0 0.0
      %900 = vmatprep.subr.mxu0 0.0
      %901 = vmatpush1.msra.mxu0 0.0
      %902 = vmatprep.subr.mxu0 0.0
      %903 = vmatpush1.msra.mxu0 0.0
      %904 = vmatprep.subr.mxu0 0.0
      %905 = vmatpush1.msra.mxu0 0.0
      %906 = vmatprep.subr.mxu0 0.0
      %907 = vmatpush1.msra.mxu0 0.0
      %908 = vmatprep.subr.mxu0 0.0
      %909 = vmatpush1.msra.mxu0 0.0
      %910 = vmatprep.subr.mxu0 0.0
      %911 = vmatpush1.msra.mxu0 0.0
      %912 = vmatprep.subr.mxu0 0.0
      %913 = vmatpush1.msra.mxu0 0.0
      %914 = vmatprep.subr.mxu0 0.0
      %915 = vmatpush1.msra.mxu0 0.0
      %916 = vmatprep.subr.mxu0 0.0
      %917 = vmatpush1.msra.mxu0 0.0
      %918 = vmatprep.subr.mxu0 0.0
      %919 = vmatpush1.msra.mxu0 0.0
      %920 = vmatprep.subr.mxu0 0.0
      %921 = vmatpush1.msra.mxu0 0.0
      %922 = vmatprep.subr.mxu0 0.0
      %923 = vmatpush1.msra.mxu0 0.0
      %924 = vmatprep.subr.mxu0 0.0
      %925 = vmatpush1.msra.mxu0 0.0
      %926 = vmatprep.subr.mxu0 0.0
      %927 = vmatpush1.msra.mxu0 0.0
      %928 = vmatprep.subr.mxu0 0.0
      %929 = vmatpush1.msra.mxu0 0.0
      %930 = vmatprep.mubr.f32.mxu0 0.0
      %931 = vmatmul.mubr.f32.gmra.mrb[0].mxu0 %v855
      %v932 = vpop.f32.mrb[0].mxu0
      %v933 = vadd.f32 %v507, %v932
      %v934 = vpop.f32.mrb[0].mxu0
      %935 = vmatprep.mubr.f32.mxu0 0.0
      %936 = vmatmul.mubr.f32.gmra.mrb[0].mxu0 %v858
      %v937 = vpop.f32.mrb[0].mxu0
      %v938 = vadd.f32 %v507, %v937
      %v939 = vpop.f32.mrb[0].mxu0
      %940 = vmatprep.mubr.f32.mxu0 0.0
      %941 = vmatmul.mubr.f32.gmra.mrb[0].mxu0 %v861
      %v942 = vpop.f32.mrb[0].mxu0
      %v943 = vadd.f32 %v507, %v942
      %v944 = vpop.f32.mrb[0].mxu0
      %945 = vmatprep.mubr.f32.mxu0 0.0
      %946 = vmatmul.mubr.f32.gmra.mrb[0].mxu0 %v864
      %v947 = vpop.f32.mrb[0].mxu0
      %v948 = vadd.f32 %v507, %v947
      %v949 = vpop.f32.mrb[0].mxu0
      %950 = vdwg.mxu0
      %955 = vrot.lane.b32.xlu0 %v933, 64
      %v956 = vpop.permute.xlu0 %955
      %957 = vrot.lane.b32.xlu0 %v938, 64
      %v958 = vpop.permute.xlu0 %957
      %959 = vrot.lane.b32.xlu0 %v943, 64
      %v960 = vpop.permute.xlu0 %959
      %961 = vrot.lane.b32.xlu0 %v948, 64
      %v962 = vpop.permute.xlu0 %961
      %vm967 = vcmask 523264
      %v968 = vsel %vm967, %v587, %v956
      %v969 = vsel %vm967, %v592, %v958
      %v970 = vsel %vm967, %v597, %v960
      %v971 = vsel %vm967, %v602, %v962
      %972 = vst [vmem:[%s199] sm:$0xff] %v968
      %973 = vst [vmem:[%s199 + $0x8] sm:$0xff] %v969
      %974 = vst [vmem:[%s199 + $0x10] sm:$0xff] %v970
      %975 = vst [vmem:[%s199 + $0x18] sm:$0xff] %v971
      %s976 = smul.u32 4, %s15
      %p977 = scmp.lt.s32.totalorder %s976, 7
      %s978 = scalar_select %p977, %s976, 7
      %s979 = smul.addr %s978, 8
      %s980 = scalar_lea.vmem %s4, %s979
      // Predicated region
      $region37: #{radial_func_forward.1} parent=35 // pred_check
        %p981 = pneg %p122
      $region38: #{radial_func_forward.1} parent=35 // pred_check_branch
        %983 = sbr.rel (%p981) target = $region40
      $region39: #{radial_func_forward.1} parent=35 // pred_region
        %s984 = smul.u32 4, %s15
      $region40: #{radial_func_forward.1} parent=35 // pred_fallthru
        _
    $region36: #{radial_func_forward.1} parent=5 // pred_fallthru
      _
    %p985 = scmp.le.s32.totalorder 2, %s10
    // Predicated region
    $region41: #{radial_func_forward.1} parent=5 // pred_check
      %p986 = pneg %p985
    $region42: #{radial_func_forward.1} parent=5 // pred_check_branch
      %988 = sbr.rel (%p986) target = $region44
    $region43: #{radial_func_forward.1} parent=5 // pred_region
      %s989 = ssub.s32 %s10, 2
      // Predicated region
      $region45: #{radial_func_forward.1} parent=43 // pred_check
        %p990 = pneg %p128
      $region46: #{radial_func_forward.1} parent=43 // pred_check_branch
        %992 = sbr.rel (%p990) target = $region48
      $region47: #{radial_func_forward.1} parent=43 // pred_region
        %s993 = smul.u32 4, %s16
        %p994 = scmp.lt.s32.totalorder %s993, 7
        %s995 = scalar_select %p994, %s993, 7
        %s996 = smul.addr %s995, 8
        %s997 = scalar_lea.vmem %s4, %s996
      $region48: #{radial_func_forward.1} parent=43 // pred_fallthru
        _
    $region44: #{radial_func_forward.1} parent=5 // pred_fallthru
      _
  $region6: #{radial_func_forward.1} parent=0 // loop_footer
    %s14 = sadd.s32 1, %s10
  $region7: #{radial_func_forward.1} parent=0 // loop_footer_branch
    %9 = sbr.rel target = $region3
  $region8: #{radial_func_forward.1} parent=0 // loop_exit
    _

</llo_original>
